<compile_context>
chip_gen: v7x
topology: tpu7x:2x2x1
jax: 0.10.0
libtpu: 0.0.40
codegen_flags: <defaults>
</compile_context>

<pallas_src>
import jax
import jax.numpy as jnp
from jax.experimental import pallas as pl
from jax.experimental.pallas import tpu as pltpu


def _round_up(n, m):
    return ((n + m - 1) // m) * m


def _prod(xs):
    p = 1
    for v in xs:
        p *= int(v)
    return p


# ---------------------------------------------------------------------------
# Device introspection (per-generation VMEM budget / batch-tile target).
# ---------------------------------------------------------------------------
def _device_kind():
    try:
        return jax.devices()[0].device_kind.lower()
    except Exception:
        return ""


def _tpu_vmem_bytes():
    try:
        return int(pltpu.get_tpu_info().vmem_capacity_bytes)
    except Exception:
        # Fallback: v7x has 64 MiB/TC, v5e/v6e have 128 MiB.
        return (64 << 20) if "7" in _device_kind() else (128 << 20)


def _probe_pipeline_mode():
    """True if this JAX build supports BlockSpec(pipeline_mode=pl.Buffered(k))."""
    try:
        pl.BlockSpec((8, 128), lambda i: (0, 0), pipeline_mode=pl.Buffered(1))
        return True
    except Exception:
        return False


_HAS_PIPELINE_MODE = _probe_pipeline_mode()


def _const_spec(shape, grid_rank):
    """Constant-index BlockSpec; single-buffered (no wasted 2nd copy) if supported."""
    zeros = (0,) * len(shape)
    if grid_rank == 1:
        idx = lambda i: zeros
    else:
        idx = lambda i, l: zeros
    if _HAS_PIPELINE_MODE:
        return pl.BlockSpec(shape, idx, pipeline_mode=pl.Buffered(1))
    return pl.BlockSpec(shape, idx)


# ---------------------------------------------------------------------------
# Kernels
# ---------------------------------------------------------------------------
def _mlp_kernel_streamed(x_ref, w_in_ref, b_in_ref, w_hid_ref, b_hid_ref,
                         w_out_ref, b_out_ref, o_ref, h_ref):
    """grid = (batch_tiles, n_hidden): hidden layer l = program_id(1) per step."""
    l = pl.program_id(1)
    cdt = h_ref.dtype  # compute dtype; MXU accumulation is always f32

    # Input layer + ReLU (first layer step of this batch tile only).
    @pl.when(l == 0)
    def _():
        a = jnp.dot(x_ref[...], w_in_ref[...], preferred_element_type=jnp.float32)
        h_ref[...] = jnp.maximum(a + b_in_ref[...], 0.0).astype(cdt)

    # Hidden layer l + ReLU.  w_hid_ref block is (1, dh, dh) for this layer only.
    a = jnp.dot(h_ref[...], w_hid_ref[0], preferred_element_type=jnp.float32)
    h_ref[...] = jnp.maximum(a + b_hid_ref[0], 0.0).astype(cdt)

    # Output layer (no output activation by default) on the last layer step.
    @pl.when(l == pl.num_programs(1) - 1)
    def _():
        out = jnp.dot(h_ref[...], w_out_ref[...], preferred_element_type=jnp.float32)
        o_ref[...] = (out + b_out_ref[...]).astype(o_ref.dtype)


def _mlp_kernel_resident(x_ref, w_in_ref, b_in_ref, w_hid_ref, b_hid_ref,
                         w_out_ref, b_out_ref, o_ref, h_ref):
    """grid = (batch_tiles,): whole weight stack VMEM-resident, layer loop in-kernel."""
    cdt = h_ref.dtype
    n_hid = w_hid_ref.shape[0]

    a = jnp.dot(x_ref[...], w_in_ref[...], preferred_element_type=jnp.float32)
    h_ref[...] = jnp.maximum(a + b_in_ref[...], 0.0).astype(cdt)

    def body(l, carry):
        a = jnp.dot(h_ref[...], w_hid_ref[l], preferred_element_type=jnp.float32)
        h_ref[...] = jnp.maximum(a + b_hid_ref[l], 0.0).astype(cdt)
        return carry

    jax.lax.fori_loop(0, n_hid, body, 0, unroll=(n_hid <= 8))

    out = jnp.dot(h_ref[...], w_out_ref[...], preferred_element_type=jnp.float32)
    o_ref[...] = (out + b_out_ref[...]).astype(o_ref.dtype)


# ---------------------------------------------------------------------------
# Parameter prep (one-time; hoisted out of the per-call forward path)
# ---------------------------------------------------------------------------
def prepare_params(params, *, compute_dtype=jnp.bfloat16, feature_align=128):
    """Pad/cast weights to lane-dense (multiple-of-128) shapes, once."""
    if isinstance(params, dict) and params.get("_prepared", False):
        return params
    w_in, w_hid, w_out = params["w_in"], params["w_hid"], params["w_out"]
    d_in, d_hidden = w_in.shape
    n_hidden = w_hid.shape[0]
    d_out = w_out.shape[1]
    fa = feature_align
    d_in_p = _round_up(d_in, fa)
    d_h_p = _round_up(d_hidden, fa)
    d_out_p = _round_up(d_out, fa)

    b_in = jnp.asarray(params["b_in"], jnp.float32).reshape(1, d_hidden)
    b_hid = jnp.asarray(params["b_hid"], jnp.float32).reshape(n_hidden, 1, d_hidden)
    b_out = jnp.asarray(params["b_out"], jnp.float32).reshape(1, d_out)

    arrays = dict(
        w_in=jnp.pad(w_in, ((0, d_in_p - d_in),
                            (0, d_h_p - d_hidden))).astype(compute_dtype),
        b_in=jnp.pad(b_in, ((0, 0), (0, d_h_p - d_hidden))),
        w_hid=jnp.pad(w_hid, ((0, 0), (0, d_h_p - d_hidden),
                              (0, d_h_p - d_hidden))).astype(compute_dtype),
        b_hid=jnp.pad(b_hid, ((0, 0), (0, 0), (0, d_h_p - d_hidden))),
        w_out=jnp.pad(w_out, ((0, d_h_p - d_hidden),
                              (0, d_out_p - d_out))).astype(compute_dtype),
        b_out=jnp.pad(b_out, ((0, 0), (0, d_out_p - d_out))),
    )
    meta = dict(d_in=d_in, d_hidden=d_hidden, d_out=d_out, n_hidden=n_hidden,
                d_in_p=d_in_p, d_h_p=d_h_p, d_out_p=d_out_p,
                compute_dtype=jnp.dtype(compute_dtype))
    return dict(arrays=arrays, meta=meta, _prepared=True)


# ---------------------------------------------------------------------------
# Planning: mode (resident vs streamed), batch tile, VMEM limit
# ---------------------------------------------------------------------------
def _auto_plan(b, d_in_p, d_h_p, d_out_p, n_hidden, cdt, out_dtype, batch_tile):
    vmem = _tpu_vmem_bytes()
    headroom = (20 << 20) if vmem > (96 << 20) else (12 << 20)
    vmem_limit = max(32 << 20, vmem - headroom)        # ≈52 MiB v7x, ≈108 MiB v5e/v6e
    budget = int(vmem_limit * 0.85)                    # leave compiler scratch room

    wb = jnp.dtype(cdt).itemsize
    ob = jnp.dtype(out_dtype).itemsize

    w_in_b = d_in_p * d_h_p * wb
    w_out_b = d_h_p * d_out_p * wb
    w_hid_b = n_hidden * d_h_p * d_h_p * wb
    bias_b = (n_hidden + 2) * d_h_p * 4 + d_out_p * 4

    resident_bytes = w_in_b + w_out_b + w_hid_b + bias_b
    use_resident = resident_bytes <= budget // 2

    if use_resident:
        fixed = resident_bytes
    else:
        # single-buffered w_in/w_out, double-buffered per-layer hidden block
        fixed = w_in_b + w_out_b + 2 * d_h_p * d_h_p * wb + 2 * bias_b
    # per-row cost: x tile (2 bufs) + out tile (2 bufs) + h scratch + f32 temps
    per_row = 2 * d_in_p * wb + 2 * d_out_p * ob + d_h_p * wb + 3 * d_h_p * 4

    if batch_tile is None:
        # v5e is already at its compute ridge around bt~256-512; v6e/v7x want ~1024
        # to stop re-streaming the d_h x d_h weights per batch tile.
        target = 512 if "v5" in _device_kind() else 1024
    else:
        target = int(batch_tile)

    bt_cap = (budget - fixed) // max(per_row, 1)
    bt = max(8, min(target, bt_cap))
    bt = max(8, (bt // 8) * 8)
    bt = min(bt, _round_up(b, 8))

    # Guarantee >=2 batch tiles when the batch permits (v7x has 2 TensorCores;
    # the "parallel" batch axis only feeds both cores with >=2 tiles).
    if b > 8 and _round_up(b, bt) // bt < 2:
        bt = max(8, _round_up((b + 1) // 2, 8))

    return use_resident, bt, vmem_limit


# ---------------------------------------------------------------------------
# Forward
# ---------------------------------------------------------------------------
def arbitrary_shape_rectangular_dnn(x, params, out_shape, *,
                                    batch_tile=None,
                                    compute_dtype=jnp.bfloat16,
                                    feature_align=128,
                                    vmem_limit_bytes=None,
                                    force_mode=None):
    """Forward pass: x (..., d_in) -> (..., *out_shape).

    `params` may be raw (init_params output) or the output of prepare_params
    (preferred: avoids a per-call pad/cast pass over all weights).
    """
    prepped = prepare_params(params, compute_dtype=compute_dtype,
                             feature_align=feature_align)
    arrs, meta = prepped["arrays"], prepped["meta"]
    cdt = meta["compute_dtype"]
    d_in, d_out = meta["d_in"], meta["d_out"]
    d_in_p, d_h_p, d_out_p = meta["d_in_p"], meta["d_h_p"], meta["d_out_p"]
    n_hidden = meta["n_hidden"]
    assert n_hidden >= 1, "kernel requires at least one hidden layer"
    assert x.shape[-1] == d_in, (x.shape, d_in)
    assert _prod(out_shape) == d_out, (out_shape, d_out)

    lead = x.shape[:-1]
    out_dtype = x.dtype

    x2 = x.reshape(-1, d_in)
    b = x2.shape[0]

    use_resident, bt, auto_vmem = _auto_plan(
        b, d_in_p, d_h_p, d_out_p, n_hidden, cdt, out_dtype, batch_tile)
    if force_mode == "resident":
        use_resident = True
    elif force_mode == "streamed":
        use_resident = False
    if vmem_limit_bytes is None:
        vmem_limit_bytes = auto_vmem

    b_pad = _round_up(b, bt)
    # Fuse the compute-dtype cast into the pad: single HBM copy of x, half the
    # x-tile DMA when compute_dtype is bf16, no per-tile VPU cast in-kernel.
    x2 = jnp.pad(x2.astype(cdt), ((0, b_pad - b), (0, d_in_p - d_in)))

    args = (x2, arrs["w_in"], arrs["b_in"], arrs["w_hid"], arrs["b_hid"],
            arrs["w_out"], arrs["b_out"])
    out_sds = jax.ShapeDtypeStruct((b_pad, d_out_p), out_dtype)

    if use_resident:
        out = pl.pallas_call(
            _mlp_kernel_resident,
            out_shape=out_sds,
            grid_spec=pltpu.PrefetchScalarGridSpec(
                num_scalar_prefetch=0,
                grid=(b_pad // bt,),
                in_specs=[
                    pl.BlockSpec((bt, d_in_p), lambda i: (i, 0)),       # x tile
                    _const_spec((d_in_p, d_h_p), 1),                    # w_in
                    _const_spec((1, d_h_p), 1),                         # b_in
                    _const_spec((n_hidden, d_h_p, d_h_p), 1),           # w_hid (all)
                    _const_spec((n_hidden, 1, d_h_p), 1),               # b_hid (all)
                    _const_spec((d_h_p, d_out_p), 1),                   # w_out
                    _const_spec((1, d_out_p), 1),                       # b_out
                ],
                out_specs=pl.BlockSpec((bt, d_out_p), lambda i: (i, 0)),
                scratch_shapes=[pltpu.VMEM((bt, d_h_p), cdt)],          # h carry
            ),
            compiler_params=pltpu.CompilerParams(
                dimension_semantics=("parallel",),
                vmem_limit_bytes=int(vmem_limit_bytes)),
        )(*args)
    else:
        out = pl.pallas_call(
            _mlp_kernel_streamed,
            out_shape=out_sds,
            grid_spec=pltpu.PrefetchScalarGridSpec(
                num_scalar_prefetch=0,
                grid=(b_pad // bt, n_hidden),
                in_specs=[
                    pl.BlockSpec((bt, d_in_p), lambda i, l: (i, 0)),    # x tile
                    _const_spec((d_in_p, d_h_p), 2),                    # w_in
                    _const_spec((1, d_h_p), 2),                         # b_in
                    pl.BlockSpec((1, d_h_p, d_h_p), lambda i, l: (l, 0, 0)),  # w_hid[l]
                    pl.BlockSpec((1, 1, d_h_p), lambda i, l: (l, 0, 0)),      # b_hid[l]
                    _const_spec((d_h_p, d_out_p), 2),                   # w_out
                    _const_spec((1, d_out_p), 2),                       # b_out
                ],
                out_specs=pl.BlockSpec((bt, d_out_p), lambda i, l: (i, 0)),
                scratch_shapes=[pltpu.VMEM((bt, d_h_p), cdt)],          # h carry
            ),
            compiler_params=pltpu.CompilerParams(
                dimension_semantics=("parallel", "arbitrary"),
                vmem_limit_bytes=int(vmem_limit_bytes)),
        )(*args)

    out = out[:b, :d_out]
    return out.reshape(*lead, *out_shape)


# ---------------------------------------------------------------------------
# Init + reference
# ---------------------------------------------------------------------------
def init_params(key, d_in, d_hidden, n_hidden, d_out):
    """Deterministic init mimicking torch.nn.Linear default U(-1/sqrt(fan_in), .)."""
    assert n_hidden >= 1
    ks = jax.random.split(key, 2 * (n_hidden + 2))

    def lin(kw, kb, fan_in, fan_out):
        bound = 1.0 / jnp.sqrt(jnp.float32(fan_in))
        w = jax.random.uniform(kw, (fan_in, fan_out), jnp.float32, -bound, bound)
        b = jax.random.uniform(kb, (1, fan_out), jnp.float32, -bound, bound)
        return w, b

    w_in, b_in = lin(ks[0], ks[1], d_in, d_hidden)
    w_hid, b_hid = [], []
    for i in range(n_hidden):
        w, b = lin(ks[2 + 2 * i], ks[3 + 2 * i], d_hidden, d_hidden)
        w_hid.append(w)
        b_hid.append(b)
    w_hid = jnp.stack(w_hid)                 # (n_hidden, d_hidden, d_hidden)
    b_hid = jnp.stack(b_hid)                 # (n_hidden, 1, d_hidden)
    w_out, b_out = lin(ks[-2], ks[-1], d_hidden, d_out)
    return dict(w_in=w_in, b_in=b_in, w_hid=w_hid, b_hid=b_hid,
                w_out=w_out, b_out=b_out)


def _reference(x, params, out_shape):
    """Pure-JAX f32 reference for correctness checking."""
    d_in = x.shape[-1]
    lead = x.shape[:-1]
    h = x.reshape(-1, d_in).astype(jnp.float32)
    h = jnp.maximum(h @ params["w_in"] + params["b_in"], 0.0)
    for i in range(params["w_hid"].shape[0]):
        h = jnp.maximum(h @ params["w_hid"][i] + params["b_hid"][i], 0.0)
    y = h @ params["w_out"] + params["b_out"]
    return y.reshape(*lead, *out_shape)


if __name__ == "__main__":
    # Small shapes consistent with the module's forward.
    d_in, d_hidden, n_hidden = 8, 32, 2
    out_shape = (4, 3)                       # d_out = 12
    d_out = _prod(out_shape)

    key = jax.random.PRNGKey(0)
    kx, kx2, kp = jax.random.split(key, 3)
    # x has arbitrary leading dims (2, 4) and last dim d_in.
    x = jax.random.normal(kx, (2, 4, d_in), jnp.float32)
    params = init_params(kp, d_in, d_hidden, n_hidden, d_out)
    y_ref = _reference(x, params, out_shape)

    # One-time parameter prep (hoisted out of the forward hot path).
    prep_f32 = prepare_params(params, compute_dtype=jnp.float32)
    prep_bf16 = prepare_params(params, compute_dtype=jnp.bfloat16)

    # f32 compute, weights-resident kernel (auto-selected for this small net):
    # bit-faithful to the module semantics.
    y_f32 = jax.block_until_ready(
        arbitrary_shape_rectangular_dnn(x, prep_f32, out_shape))
    assert y_f32.shape == (2, 4, 4, 3), y_f32.shape
    assert jnp.allclose(y_f32, y_ref, atol=1e-5, rtol=1e-5), "f32 resident mismatch"

    # bf16 compute (default, MXU-friendly): f32 accumulation, looser tolerance.
    y_bf16 = jax.block_until_ready(
        arbitrary_shape_rectangular_dnn(x, prep_bf16, out_shape))
    assert y_bf16.shape == (2, 4, 4, 3), y_bf16.shape
    assert jnp.allclose(y_bf16, y_ref, atol=5e-2, rtol=5e-2), "bf16 resident mismatch"

    # Force the layer-streaming (batch, layer)-grid kernel with multiple batch
    # tiles + padded batch rows to exercise the large-model path too.
    x_big = jax.random.normal(kx2, (2, 12, d_in), jnp.float32)
    y_ref_big = _reference(x_big, params, out_shape)
    y_str = jax.block_until_ready(
        arbitrary_shape_rectangular_dnn(x_big, prep_f32, out_shape,
                                        force_mode="streamed"))
    assert y_str.shape == (2, 12, 4, 3), y_str.shape
    assert jnp.allclose(y_str, y_ref_big, atol=1e-5, rtol=1e-5), "f32 streamed mismatch"

    print("KERNEL_OK")
</pallas_src>

<mosaic_0001>
module attributes {stable_mosaic.version = 11 : i64} {
  func.func @_mlp_kernel_resident(%arg0: i32, %arg1: memref<8x128xf32, #tpu.memory_space<vmem>>, %arg2: memref<128x128xf32, #tpu.memory_space<vmem>>, %arg3: memref<1x128xf32, #tpu.memory_space<vmem>>, %arg4: memref<2x128x128xf32, #tpu.memory_space<vmem>>, %arg5: memref<2x1x128xf32, #tpu.memory_space<vmem>>, %arg6: memref<128x128xf32, #tpu.memory_space<vmem>>, %arg7: memref<1x128xf32, #tpu.memory_space<vmem>>, %arg8: memref<8x128xf32, #tpu.memory_space<vmem>>, %arg9: memref<8x128xf32, #tpu.memory_space<vmem>>) attributes {dimension_semantics = [#tpu.dimension_semantics<parallel>], iteration_bounds = array<i64: 1>, scalar_prefetch = 0 : i64, scratch_operands = 1 : i64, tpu.core_type = #tpu.core_type<tc>, window_params = [{transform_indices = @transform_0, window_bounds = array<i64: 8, 128>}, {pipeline_mode = #tpu.pipeline_mode<synchronous>, transform_indices = @transform_1, window_bounds = array<i64: 128, 128>}, {pipeline_mode = #tpu.pipeline_mode<synchronous>, transform_indices = @transform_2, window_bounds = array<i64: 1, 128>}, {pipeline_mode = #tpu.pipeline_mode<synchronous>, transform_indices = @transform_3, window_bounds = array<i64: 2, 128, 128>}, {pipeline_mode = #tpu.pipeline_mode<synchronous>, transform_indices = @transform_4, window_bounds = array<i64: 2, 1, 128>}, {pipeline_mode = #tpu.pipeline_mode<synchronous>, transform_indices = @transform_5, window_bounds = array<i64: 128, 128>}, {pipeline_mode = #tpu.pipeline_mode<synchronous>, transform_indices = @transform_6, window_bounds = array<i64: 1, 128>}, {transform_indices = @transform_7, window_bounds = array<i64: 8, 128>}]} {
    %c0 = arith.constant 0 : index
    %c0_0 = arith.constant 0 : index
    %0 = vector.load %arg1[%c0, %c0_0] : memref<8x128xf32, #tpu.memory_space<vmem>>, vector<8x128xf32>
    %c0_1 = arith.constant 0 : index
    %c0_2 = arith.constant 0 : index
    %1 = vector.load %arg2[%c0_1, %c0_2] : memref<128x128xf32, #tpu.memory_space<vmem>>, vector<128x128xf32>
    %cst = arith.constant dense<0.000000e+00> : vector<8x128xf32>
    %2 = tpu.matmul %0, %1, %cst {dimension_numbers = #tpu.dot_dimension_numbers<[1], [0], [0], [1], [0, 0, 1, 1], [], []>} : vector<8x128xf32>, vector<128x128xf32>, vector<8x128xf32> -> vector<8x128xf32>
    %c0_3 = arith.constant 0 : index
    %c0_4 = arith.constant 0 : index
    %3 = vector.load %arg3[%c0_3, %c0_4] : memref<1x128xf32, #tpu.memory_space<vmem>>, vector<1x128xf32>
    %4 = vector.broadcast %3 : vector<1x128xf32> to vector<8x128xf32>
    %5 = arith.addf %2, %4 : vector<8x128xf32>
    %cst_5 = arith.constant 0.000000e+00 : f32
    %6 = vector.broadcast %cst_5 : f32 to vector<8x128xf32>
    %7 = arith.maximumf %5, %6 : vector<8x128xf32>
    %c0_6 = arith.constant 0 : index
    %c0_7 = arith.constant 0 : index
    %8 = vector.load %arg9[%c0_6, %c0_7] : memref<8x128xf32, #tpu.memory_space<vmem>>, vector<8x128xf32>
    tpu.vector_store %arg9[%c0_6, %c0_7], %7 {strides = array<i32>} : memref<8x128xf32, #tpu.memory_space<vmem>>, vector<8x128xf32>,
    %c0_i32 = arith.constant 0 : i32
    %c0_8 = arith.constant 0 : index
    %c0_9 = arith.constant 0 : index
    %9 = vector.load %arg9[%c0_8, %c0_9] : memref<8x128xf32, #tpu.memory_space<vmem>>, vector<8x128xf32>
    %10 = arith.index_cast %c0_i32 : i32 to index
    %c0_10 = arith.constant 0 : index
    %c0_11 = arith.constant 0 : index
    %11 = vector.load %arg4[%10, %c0_10, %c0_11] : memref<2x128x128xf32, #tpu.memory_space<vmem>>, vector<1x128x128xf32>
    %12 = vector.shape_cast %11 : vector<1x128x128xf32> to vector<128x128xf32>
    %cst_12 = arith.constant dense<0.000000e+00> : vector<8x128xf32>
    %13 = tpu.matmul %9, %12, %cst_12 {dimension_numbers = #tpu.dot_dimension_numbers<[1], [0], [0], [1], [0, 0, 1, 1], [], []>} : vector<8x128xf32>, vector<128x128xf32>, vector<8x128xf32> -> vector<8x128xf32>
    %14 = arith.index_cast %c0_i32 : i32 to index
    %c0_13 = arith.constant 0 : index
    %c0_14 = arith.constant 0 : index
    %15 = vector.load %arg5[%14, %c0_13, %c0_14] : memref<2x1x128xf32, #tpu.memory_space<vmem>>, vector<1x1x128xf32>
    %16 = vector.shape_cast %15 : vector<1x1x128xf32> to vector<1x128xf32>
    %17 = vector.broadcast %16 : vector<1x128xf32> to vector<8x128xf32>
    %18 = arith.addf %13, %17 : vector<8x128xf32>
    %cst_15 = arith.constant 0.000000e+00 : f32
    %19 = vector.broadcast %cst_15 : f32 to vector<8x128xf32>
    %20 = arith.maximumf %18, %19 : vector<8x128xf32>
    %c0_16 = arith.constant 0 : index
    %c0_17 = arith.constant 0 : index
    %21 = vector.load %arg9[%c0_16, %c0_17] : memref<8x128xf32, #tpu.memory_space<vmem>>, vector<8x128xf32>
    tpu.vector_store %arg9[%c0_16, %c0_17], %20 {strides = array<i32>} : memref<8x128xf32, #tpu.memory_space<vmem>>, vector<8x128xf32>,
    %c1_i32 = arith.constant 1 : i32
    %c0_18 = arith.constant 0 : index
    %c0_19 = arith.constant 0 : index
    %22 = vector.load %arg9[%c0_18, %c0_19] : memref<8x128xf32, #tpu.memory_space<vmem>>, vector<8x128xf32>
    %23 = arith.index_cast %c1_i32 : i32 to index
    %c0_20 = arith.constant 0 : index
    %c0_21 = arith.constant 0 : index
    %24 = vector.load %arg4[%23, %c0_20, %c0_21] : memref<2x128x128xf32, #tpu.memory_space<vmem>>, vector<1x128x128xf32>
    %25 = vector.shape_cast %24 : vector<1x128x128xf32> to vector<128x128xf32>
    %cst_22 = arith.constant dense<0.000000e+00> : vector<8x128xf32>
    %26 = tpu.matmul %22, %25, %cst_22 {dimension_numbers = #tpu.dot_dimension_numbers<[1], [0], [0], [1], [0, 0, 1, 1], [], []>} : vector<8x128xf32>, vector<128x128xf32>, vector<8x128xf32> -> vector<8x128xf32>
    %27 = arith.index_cast %c1_i32 : i32 to index
    %c0_23 = arith.constant 0 : index
    %c0_24 = arith.constant 0 : index
    %28 = vector.load %arg5[%27, %c0_23, %c0_24] : memref<2x1x128xf32, #tpu.memory_space<vmem>>, vector<1x1x128xf32>
    %29 = vector.shape_cast %28 : vector<1x1x128xf32> to vector<1x128xf32>
    %30 = vector.broadcast %29 : vector<1x128xf32> to vector<8x128xf32>
    %31 = arith.addf %26, %30 : vector<8x128xf32>
    %cst_25 = arith.constant 0.000000e+00 : f32
    %32 = vector.broadcast %cst_25 : f32 to vector<8x128xf32>
    %33 = arith.maximumf %31, %32 : vector<8x128xf32>
    %c0_26 = arith.constant 0 : index
    %c0_27 = arith.constant 0 : index
    %34 = vector.load %arg9[%c0_26, %c0_27] : memref<8x128xf32, #tpu.memory_space<vmem>>, vector<8x128xf32>
    tpu.vector_store %arg9[%c0_26, %c0_27], %33 {strides = array<i32>} : memref<8x128xf32, #tpu.memory_space<vmem>>, vector<8x128xf32>,
    %c2_i32 = arith.constant 2 : i32
    %c0_28 = arith.constant 0 : index
    %c0_29 = arith.constant 0 : index
    %35 = vector.load %arg9[%c0_28, %c0_29] : memref<8x128xf32, #tpu.memory_space<vmem>>, vector<8x128xf32>
    %c0_30 = arith.constant 0 : index
    %c0_31 = arith.constant 0 : index
    %36 = vector.load %arg6[%c0_30, %c0_31] : memref<128x128xf32, #tpu.memory_space<vmem>>, vector<128x128xf32>
    %cst_32 = arith.constant dense<0.000000e+00> : vector<8x128xf32>
    %37 = tpu.matmul %35, %36, %cst_32 {dimension_numbers = #tpu.dot_dimension_numbers<[1], [0], [0], [1], [0, 0, 1, 1], [], []>} : vector<8x128xf32>, vector<128x128xf32>, vector<8x128xf32> -> vector<8x128xf32>
    %c0_33 = arith.constant 0 : index
    %c0_34 = arith.constant 0 : index
    %38 = vector.load %arg7[%c0_33, %c0_34] : memref<1x128xf32, #tpu.memory_space<vmem>>, vector<1x128xf32>
    %39 = vector.broadcast %38 : vector<1x128xf32> to vector<8x128xf32>
    %40 = arith.addf %37, %39 : vector<8x128xf32>
    %c0_35 = arith.constant 0 : index
    %c0_36 = arith.constant 0 : index
    %41 = vector.load %arg8[%c0_35, %c0_36] : memref<8x128xf32, #tpu.memory_space<vmem>>, vector<8x128xf32>
    tpu.vector_store %arg8[%c0_35, %c0_36], %40 {strides = array<i32>} : memref<8x128xf32, #tpu.memory_space<vmem>>, vector<8x128xf32>,
    return
  }
  func.func @transform_0(%arg0: i32) -> (i32, i32) {
    %c0_i32 = arith.constant 0 : i32
    %c0_i32_0 = arith.constant 0 : i32
    return %arg0, %c0_i32 : i32, i32
  }
  func.func @transform_1(%arg0: i32) -> (i32, i32) {
    %c0_i32 = arith.constant 0 : i32
    %c0_i32_0 = arith.constant 0 : i32
    %c0_i32_1 = arith.constant 0 : i32
    return %c0_i32, %c0_i32_0 : i32, i32
  }
  func.func @transform_2(%arg0: i32) -> (i32, i32) {
    %c0_i32 = arith.constant 0 : i32
    %c0_i32_0 = arith.constant 0 : i32
    %c0_i32_1 = arith.constant 0 : i32
    return %c0_i32, %c0_i32_0 : i32, i32
  }
  func.func @transform_3(%arg0: i32) -> (i32, i32, i32) {
    %c0_i32 = arith.constant 0 : i32
    %c0_i32_0 = arith.constant 0 : i32
    %c0_i32_1 = arith.constant 0 : i32
    %c0_i32_2 = arith.constant 0 : i32
    return %c0_i32, %c0_i32_0, %c0_i32_1 : i32, i32, i32
  }
  func.func @transform_4(%arg0: i32) -> (i32, i32, i32) {
    %c0_i32 = arith.constant 0 : i32
    %c0_i32_0 = arith.constant 0 : i32
    %c0_i32_1 = arith.constant 0 : i32
    %c0_i32_2 = arith.constant 0 : i32
    return %c0_i32, %c0_i32_0, %c0_i32_1 : i32, i32, i32
  }
  func.func @transform_5(%arg0: i32) -> (i32, i32) {
    %c0_i32 = arith.constant 0 : i32
    %c0_i32_0 = arith.constant 0 : i32
    %c0_i32_1 = arith.constant 0 : i32
    return %c0_i32, %c0_i32_0 : i32, i32
  }
  func.func @transform_6(%arg0: i32) -> (i32, i32) {
    %c0_i32 = arith.constant 0 : i32
    %c0_i32_0 = arith.constant 0 : i32
    %c0_i32_1 = arith.constant 0 : i32
    return %c0_i32, %c0_i32_0 : i32, i32
  }
  func.func @transform_7(%arg0: i32) -> (i32, i32) {
    %c0_i32 = arith.constant 0 : i32
    %c0_i32_0 = arith.constant 0 : i32
    return %arg0, %c0_i32 : i32, i32
  }
}

</mosaic_0001>

<llo_original>
// kernel: tpu_custom_call.1
$region0: #{tpu_custom_call.1}
  #allocation0 [shape = 'u32[]', space=smem, size = 0x4, offset = 0x4, fixed_abs, tag = 'smem constant byte address 0x4 - core index']
  #allocation1 [shape = 'u32[144,128]{1,0:T(1,128)}', space=vmem, size = 0x12000, scoped, tag = 'internal scratch']
  #allocation2 [shape = 'f32[8,128]{1,0:T(8,128)}', space=vmem, size = 0x1000, scoped, tag = 'scratch operand']
  %s0 = inlined_call_operand.hbm [shape: f32[8,128], index: 0, kind: input, shape index: {}]
  %s1 = inlined_call_operand.hbm [shape: f32[128,128], index: 1, kind: input, shape index: {}]
  %s2 = inlined_call_operand.hbm [shape: f32[1,128], index: 2, kind: input, shape index: {}]
  %s3 = inlined_call_operand.hbm [shape: f32[2,128,128], index: 3, kind: input, shape index: {}]
  %s4 = inlined_call_operand.hbm [shape: f32[2,1,128], index: 4, kind: input, shape index: {}]
  %s5 = inlined_call_operand.hbm [shape: f32[128,128], index: 5, kind: input, shape index: {}]
  %s6 = inlined_call_operand.hbm [shape: f32[1,128], index: 6, kind: input, shape index: {}]
  %s7 = inlined_call_operand.hbm [shape: f32[8,128], index: 7, kind: output, shape index: {}]
  %s8 = sld [smem:[#allocation0]]
  $region66: #{tpu_custom_call.1} parent=0
    _
  %s10 = ssub.s32 1, %s8
  %s11 = scalar_select 0, %s10, %s8
  $region1: #{tpu_custom_call.1} parent=0
    #allocation3 [shape = 'u8[4096]{0}', space=vmem, size = 0x1000, scoped, tag = 'input window, operand 0, single buffered']
    #allocation4 [shape = 's32[1]{0}', space=sflag, size = 0x4, scoped, tag = 'scoped memory for tpu_custom_call.1']
    #allocation5 [shape = 's32[1]{0}', space=sflag, size = 0x4, scoped, tag = 'scoped memory for tpu_custom_call.1']
    #allocation6 [shape = 'u8[65536]{0}', space=vmem, size = 0x10000, scoped, tag = 'input window, operand 1, single buffered']
    #allocation7 [shape = 's32[1]{0}', space=sflag, size = 0x4, scoped, tag = 'scoped memory for tpu_custom_call.1']
    #allocation8 [shape = 'u8[512]{0}', space=vmem, size = 0x400, scoped, tag = 'input window, operand 2, single buffered']
    #allocation9 [shape = 'u8[131072]{0}', space=vmem, size = 0x20000, scoped, tag = 'input window, operand 3, single buffered']
    #allocation10 [shape = 's32[1]{0}', space=sflag, size = 0x4, scoped, tag = 'scoped memory for tpu_custom_call.1']
    #allocation11 [shape = 'u8[1024]{0}', space=vmem, size = 0x400, scoped, tag = 'input window, operand 4, single buffered']
    #allocation12 [shape = 'u8[65536]{0}', space=vmem, size = 0x10000, scoped, tag = 'input window, operand 5, single buffered']
    #allocation13 [shape = 's32[1]{0}', space=sflag, size = 0x4, scoped, tag = 'scoped memory for tpu_custom_call.1']
    #allocation14 [shape = 'u8[512]{0}', space=vmem, size = 0x400, scoped, tag = 'input window, operand 6, single buffered']
    #allocation15 [shape = 'u8[4096]{0}', space=vmem, size = 0x1000, scoped, tag = 'output window, operand 0, single buffered']
    %12 = vsyncpa [#allocation4], 0
    %13 = vsyncpa [#allocation7], 0
    %14 = vsyncpa [#allocation10], 0
    %15 = vsyncpa [#allocation13], 0
    %16 = vsyncpa [#allocation5], 0
    // Predicated region
    $region2: #{tpu_custom_call.1} parent=1 // pred_check
      _
    $region3: #{tpu_custom_call.1} parent=1 // pred_check_branch
      %18 = sbr.rel (0) target = $region5
    $region4: #{tpu_custom_call.1} parent=1 // pred_region
      %s20 = ssub.s32 128, 128
      %21 = vsyncadd [#allocation4], %s20
      %s23 = sshll.u32 [#allocation3], 4
      %s24 = int_to_ptr.vmem [resolvable:$true] %s23
      %26 = dma.hbm_to_vmem [thread:$0]  %s0, 128, %s24, [#allocation4]
    $region5: #{tpu_custom_call.1} parent=1 // pred_fallthru
      _
    // Predicated region
    $region6: #{tpu_custom_call.1} parent=1 // pred_check
      _
    $region7: #{tpu_custom_call.1} parent=1 // pred_check_branch
      %28 = sbr.rel (0) target = $region9
    $region8: #{tpu_custom_call.1} parent=1 // pred_region
      %s30 = ssub.s32 2048, 2048
      %31 = vsyncadd [#allocation7], %s30
      %s32 = sshll.u32 [#allocation6], 4
      %s33 = int_to_ptr.vmem [resolvable:$true] %s32
      %38 = dma.hbm_to_vmem [thread:$0]  %s1, 2048, %s33, [#allocation7], 128, 128, 8
    $region9: #{tpu_custom_call.1} parent=1 // pred_fallthru
      _
    // Predicated region
    $region10: #{tpu_custom_call.1} parent=1 // pred_check
      _
    $region11: #{tpu_custom_call.1} parent=1 // pred_check_branch
      %40 = sbr.rel (0) target = $region13
    $region12: #{tpu_custom_call.1} parent=1 // pred_region
      %s42 = ssub.s32 16, 16
      %43 = vsyncadd [#allocation7], %s42
      %s45 = sshll.u32 [#allocation8], 4
      %s46 = int_to_ptr.vmem [resolvable:$true] %s45
      %48 = dma.hbm_to_vmem [thread:$0]  %s2, 16, %s46, [#allocation7]
    $region13: #{tpu_custom_call.1} parent=1 // pred_fallthru
      _
    // Predicated region
    $region14: #{tpu_custom_call.1} parent=1 // pred_check
      _
    $region15: #{tpu_custom_call.1} parent=1 // pred_check_branch
      %50 = sbr.rel (0) target = $region17
    $region16: #{tpu_custom_call.1} parent=1 // pred_region
      %s52 = ssub.s32 4096, 4096
      %53 = vsyncadd [#allocation10], %s52
      %s54 = sshll.u32 [#allocation9], 4
      %s55 = int_to_ptr.vmem [resolvable:$true] %s54
      %60 = dma.hbm_to_vmem [thread:$0]  %s3, 4096, %s55, [#allocation10], 128, 128, 8
    $region17: #{tpu_custom_call.1} parent=1 // pred_fallthru
      _
    // Predicated region
    $region18: #{tpu_custom_call.1} parent=1 // pred_check
      _
    $region19: #{tpu_custom_call.1} parent=1 // pred_check_branch
      %62 = sbr.rel (0) target = $region21
    $region20: #{tpu_custom_call.1} parent=1 // pred_region
      %s64 = ssub.s32 32, 32
      %65 = vsyncadd [#allocation10], %s64
      %s66 = sshll.u32 [#allocation11], 4
      %s67 = int_to_ptr.vmem [resolvable:$true] %s66
      %72 = dma.hbm_to_vmem [thread:$0]  %s4, 32, %s67, [#allocation10], 16, 16, 1
    $region21: #{tpu_custom_call.1} parent=1 // pred_fallthru
      _
    // Predicated region
    $region22: #{tpu_custom_call.1} parent=1 // pred_check
      _
    $region23: #{tpu_custom_call.1} parent=1 // pred_check_branch
      %74 = sbr.rel (0) target = $region25
    $region24: #{tpu_custom_call.1} parent=1 // pred_region
      %s76 = ssub.s32 2048, 2048
      %77 = vsyncadd [#allocation13], %s76
      %s78 = sshll.u32 [#allocation12], 4
      %s79 = int_to_ptr.vmem [resolvable:$true] %s78
      %84 = dma.hbm_to_vmem [thread:$0]  %s5, 2048, %s79, [#allocation13], 128, 128, 8
    $region25: #{tpu_custom_call.1} parent=1 // pred_fallthru
      _
    // Predicated region
    $region26: #{tpu_custom_call.1} parent=1 // pred_check
      _
    $region27: #{tpu_custom_call.1} parent=1 // pred_check_branch
      %86 = sbr.rel (0) target = $region29
    $region28: #{tpu_custom_call.1} parent=1 // pred_region
      %s88 = ssub.s32 16, 16
      %89 = vsyncadd [#allocation13], %s88
      %s91 = sshll.u32 [#allocation14], 4
      %s92 = int_to_ptr.vmem [resolvable:$true] %s91
      %94 = dma.hbm_to_vmem [thread:$0]  %s6, 16, %s92, [#allocation13]
    $region29: #{tpu_custom_call.1} parent=1 // pred_fallthru
      _
    // Predicated region
    $region30: #{tpu_custom_call.1} parent=1 // pred_check
      _
    $region31: #{tpu_custom_call.1} parent=1 // pred_check_branch
      %96 = sbr.rel (0) target = $region33
    $region32: #{tpu_custom_call.1} parent=1 // pred_region
      %97 = dma.done [#allocation4], 128
    $region33: #{tpu_custom_call.1} parent=1 // pred_fallthru
      _
    // Predicated region
    $region34: #{tpu_custom_call.1} parent=1 // pred_check
      _
    $region35: #{tpu_custom_call.1} parent=1 // pred_check_branch
      %99 = sbr.rel (0) target = $region37
    $region36: #{tpu_custom_call.1} parent=1 // pred_region
      %100 = dma.done [#allocation7], 2048
    $region37: #{tpu_custom_call.1} parent=1 // pred_fallthru
      _
    // Predicated region
    $region38: #{tpu_custom_call.1} parent=1 // pred_check
      _
    $region39: #{tpu_custom_call.1} parent=1 // pred_check_branch
      %102 = sbr.rel (0) target = $region41
    $region40: #{tpu_custom_call.1} parent=1 // pred_region
      %103 = dma.done [#allocation7], 16
    $region41: #{tpu_custom_call.1} parent=1 // pred_fallthru
      _
    // Predicated region
    $region42: #{tpu_custom_call.1} parent=1 // pred_check
      _
    $region43: #{tpu_custom_call.1} parent=1 // pred_check_branch
      %105 = sbr.rel (0) target = $region45
    $region44: #{tpu_custom_call.1} parent=1 // pred_region
      %106 = dma.done [#allocation10], 4096
    $region45: #{tpu_custom_call.1} parent=1 // pred_fallthru
      _
    // Predicated region
    $region46: #{tpu_custom_call.1} parent=1 // pred_check
      _
    $region47: #{tpu_custom_call.1} parent=1 // pred_check_branch
      %108 = sbr.rel (0) target = $region49
    $region48: #{tpu_custom_call.1} parent=1 // pred_region
      %109 = dma.done [#allocation10], 32
    $region49: #{tpu_custom_call.1} parent=1 // pred_fallthru
      _
    // Predicated region
    $region50: #{tpu_custom_call.1} parent=1 // pred_check
      _
    $region51: #{tpu_custom_call.1} parent=1 // pred_check_branch
      %111 = sbr.rel (0) target = $region53
    $region52: #{tpu_custom_call.1} parent=1 // pred_region
      %112 = dma.done [#allocation13], 2048
    $region53: #{tpu_custom_call.1} parent=1 // pred_fallthru
      _
    // Predicated region
    $region54: #{tpu_custom_call.1} parent=1 // pred_check
      _
    $region55: #{tpu_custom_call.1} parent=1 // pred_check_branch
      %114 = sbr.rel (0) target = $region57
    $region56: #{tpu_custom_call.1} parent=1 // pred_region
      %115 = dma.done [#allocation13], 16
    $region57: #{tpu_custom_call.1} parent=1 // pred_fallthru
      _
    %v116 = vld [vmem:[#allocation3] sm:$0xff]
    %v117 = vld [vmem:[#allocation6] sm:$0xff]
    %v118 = vld [vmem:[#allocation6 + $0x8] sm:$0xff]
    %v119 = vld [vmem:[#allocation6 + $0x10] sm:$0xff]
    %v120 = vld [vmem:[#allocation6 + $0x18] sm:$0xff]
    %v121 = vld [vmem:[#allocation6 + $0x20] sm:$0xff]
    %v122 = vld [vmem:[#allocation6 + $0x28] sm:$0xff]
    %v123 = vld [vmem:[#allocation6 + $0x30] sm:$0xff]
    %v124 = vld [vmem:[#allocation6 + $0x38] sm:$0xff]
    %v125 = vld [vmem:[#allocation6 + $0x40] sm:$0xff]
    %v126 = vld [vmem:[#allocation6 + $0x48] sm:$0xff]
    %v127 = vld [vmem:[#allocation6 + $0x50] sm:$0xff]
    %v128 = vld [vmem:[#allocation6 + $0x58] sm:$0xff]
    %v129 = vld [vmem:[#allocation6 + $0x60] sm:$0xff]
    %v130 = vld [vmem:[#allocation6 + $0x68] sm:$0xff]
    %v131 = vld [vmem:[#allocation6 + $0x70] sm:$0xff]
    %v132 = vld [vmem:[#allocation6 + $0x78] sm:$0xff]
    %v133 = vld [vmem:[#allocation8] sm:$0x1]
    %v135 = vlaneseq
    %v136 = vshrl.u32 %v135, 7
    %v137 = vsub.s32 0, %v136
    %v138 = vrot.slane %v133, %v137
    %140 = vmatprep.subr.mxu0 0.0
    %141 = vmatpush1.msra.mxu0 %v117
    %142 = vmatprep.subr.mxu0 0.0
    %143 = vmatpush1.msra.mxu0 %v118
    %144 = vmatprep.subr.mxu0 0.0
    %145 = vmatpush1.msra.mxu0 %v119
    %146 = vmatprep.subr.mxu0 0.0
    %147 = vmatpush1.msra.mxu0 %v120
    %148 = vmatprep.subr.mxu0 0.0
    %149 = vmatpush1.msra.mxu0 %v121
    %150 = vmatprep.subr.mxu0 0.0
    %151 = vmatpush1.msra.mxu0 %v122
    %152 = vmatprep.subr.mxu0 0.0
    %153 = vmatpush1.msra.mxu0 %v123
    %154 = vmatprep.subr.mxu0 0.0
    %155 = vmatpush1.msra.mxu0 %v124
    %156 = vmatprep.subr.mxu0 0.0
    %157 = vmatpush1.msra.mxu0 %v125
    %158 = vmatprep.subr.mxu0 0.0
    %159 = vmatpush1.msra.mxu0 %v126
    %160 = vmatprep.subr.mxu0 0.0
    %161 = vmatpush1.msra.mxu0 %v127
    %162 = vmatprep.subr.mxu0 0.0
    %163 = vmatpush1.msra.mxu0 %v128
    %164 = vmatprep.subr.mxu0 0.0
    %165 = vmatpush1.msra.mxu0 %v129
    %166 = vmatprep.subr.mxu0 0.0
    %167 = vmatpush1.msra.mxu0 %v130
    %168 = vmatprep.subr.mxu0 0.0
    %169 = vmatpush1.msra.mxu0 %v131
    %170 = vmatprep.subr.mxu0 0.0
    %171 = vmatpush1.msra.mxu0 %v132
    %172 = vmatprep.subr.mxu0 0.0
    %173 = vmatpush1.msra.mxu0 0.0
    %174 = vmatprep.subr.mxu0 0.0
    %175 = vmatpush1.msra.mxu0 0.0
    %176 = vmatprep.subr.mxu0 0.0
    %177 = vmatpush1.msra.mxu0 0.0
    %178 = vmatprep.subr.mxu0 0.0
    %179 = vmatpush1.msra.mxu0 0.0
    %180 = vmatprep.subr.mxu0 0.0
    %181 = vmatpush1.msra.mxu0 0.0
    %182 = vmatprep.subr.mxu0 0.0
    %183 = vmatpush1.msra.mxu0 0.0
    %184 = vmatprep.subr.mxu0 0.0
    %185 = vmatpush1.msra.mxu0 0.0
    %186 = vmatprep.subr.mxu0 0.0
    %187 = vmatpush1.msra.mxu0 0.0
    %188 = vmatprep.subr.mxu0 0.0
    %189 = vmatpush1.msra.mxu0 0.0
    %190 = vmatprep.subr.mxu0 0.0
    %191 = vmatpush1.msra.mxu0 0.0
    %192 = vmatprep.subr.mxu0 0.0
    %193 = vmatpush1.msra.mxu0 0.0
    %194 = vmatprep.subr.mxu0 0.0
    %195 = vmatpush1.msra.mxu0 0.0
    %196 = vmatprep.subr.mxu0 0.0
    %197 = vmatpush1.msra.mxu0 0.0
    %198 = vmatprep.subr.mxu0 0.0
    %199 = vmatpush1.msra.mxu0 0.0
    %200 = vmatprep.subr.mxu0 0.0
    %201 = vmatpush1.msra.mxu0 0.0
    %202 = vmatprep.subr.mxu0 0.0
    %203 = vmatpush1.msra.mxu0 0.0
    %204 = vmatprep.mubr.f32.mxu0 0.0
    %205 = vmatmul.mubr.f32.gmra.mrb[0].mxu0 %v116
    %v206 = vpop.f32.mrb[0].mxu0
    %v207 = vadd.f32 %v138, %v206
    %v208 = vpop.f32.mrb[0].mxu0
    %209 = vdwg.mxu0
    %v210 = vmax.f32 %v207, 0.0
    %211 = vst [vmem:[#allocation2] sm:$0xff] %v210
    %v212 = vld [vmem:[#allocation2] sm:$0xff]
    %v213 = vld [vmem:[#allocation9] sm:$0xff]
    %v214 = vld [vmem:[#allocation9 + $0x8] sm:$0xff]
    %v215 = vld [vmem:[#allocation9 + $0x10] sm:$0xff]
    %v216 = vld [vmem:[#allocation9 + $0x18] sm:$0xff]
    %v217 = vld [vmem:[#allocation9 + $0x20] sm:$0xff]
    %v218 = vld [vmem:[#allocation9 + $0x28] sm:$0xff]
    %v219 = vld [vmem:[#allocation9 + $0x30] sm:$0xff]
    %v220 = vld [vmem:[#allocation9 + $0x38] sm:$0xff]
    %v221 = vld [vmem:[#allocation9 + $0x40] sm:$0xff]
    %v222 = vld [vmem:[#allocation9 + $0x48] sm:$0xff]
    %v223 = vld [vmem:[#allocation9 + $0x50] sm:$0xff]
    %v224 = vld [vmem:[#allocation9 + $0x58] sm:$0xff]
    %v225 = vld [vmem:[#allocation9 + $0x60] sm:$0xff]
    %v226 = vld [vmem:[#allocation9 + $0x68] sm:$0xff]
    %v227 = vld [vmem:[#allocation9 + $0x70] sm:$0xff]
    %v228 = vld [vmem:[#allocation9 + $0x78] sm:$0xff]
    %v229 = vld [vmem:[#allocation11] sm:$0x1]
    %v231 = vlaneseq
    %v232 = vshrl.u32 %v231, 7
    %v233 = vsub.s32 0, %v232
    %v234 = vrot.slane %v229, %v233
    %236 = vmatprep.subr.mxu0 0.0
    %237 = vmatpush1.msra.mxu0 %v213
    %238 = vmatprep.subr.mxu0 0.0
    %239 = vmatpush1.msra.mxu0 %v214
    %240 = vmatprep.subr.mxu0 0.0
    %241 = vmatpush1.msra.mxu0 %v215
    %242 = vmatprep.subr.mxu0 0.0
    %243 = vmatpush1.msra.mxu0 %v216
    %244 = vmatprep.subr.mxu0 0.0
    %245 = vmatpush1.msra.mxu0 %v217
    %246 = vmatprep.subr.mxu0 0.0
    %247 = vmatpush1.msra.mxu0 %v218
    %248 = vmatprep.subr.mxu0 0.0
    %249 = vmatpush1.msra.mxu0 %v219
    %250 = vmatprep.subr.mxu0 0.0
    %251 = vmatpush1.msra.mxu0 %v220
    %252 = vmatprep.subr.mxu0 0.0
    %253 = vmatpush1.msra.mxu0 %v221
    %254 = vmatprep.subr.mxu0 0.0
    %255 = vmatpush1.msra.mxu0 %v222
    %256 = vmatprep.subr.mxu0 0.0
    %257 = vmatpush1.msra.mxu0 %v223
    %258 = vmatprep.subr.mxu0 0.0
    %259 = vmatpush1.msra.mxu0 %v224
    %260 = vmatprep.subr.mxu0 0.0
    %261 = vmatpush1.msra.mxu0 %v225
    %262 = vmatprep.subr.mxu0 0.0
    %263 = vmatpush1.msra.mxu0 %v226
    %264 = vmatprep.subr.mxu0 0.0
    %265 = vmatpush1.msra.mxu0 %v227
    %266 = vmatprep.subr.mxu0 0.0
    %267 = vmatpush1.msra.mxu0 %v228
    %268 = vmatprep.subr.mxu0 0.0
    %269 = vmatpush1.msra.mxu0 0.0
    %270 = vmatprep.subr.mxu0 0.0
    %271 = vmatpush1.msra.mxu0 0.0
    %272 = vmatprep.subr.mxu0 0.0
    %273 = vmatpush1.msra.mxu0 0.0
    %274 = vmatprep.subr.mxu0 0.0
    %275 = vmatpush1.msra.mxu0 0.0
    %276 = vmatprep.subr.mxu0 0.0
    %277 = vmatpush1.msra.mxu0 0.0
    %278 = vmatprep.subr.mxu0 0.0
    %279 = vmatpush1.msra.mxu0 0.0
    %280 = vmatprep.subr.mxu0 0.0
    %281 = vmatpush1.msra.mxu0 0.0
    %282 = vmatprep.subr.mxu0 0.0
    %283 = vmatpush1.msra.mxu0 0.0
    %284 = vmatprep.subr.mxu0 0.0
    %285 = vmatpush1.msra.mxu0 0.0
    %286 = vmatprep.subr.mxu0 0.0
    %287 = vmatpush1.msra.mxu0 0.0
    %288 = vmatprep.subr.mxu0 0.0
    %289 = vmatpush1.msra.mxu0 0.0
    %290 = vmatprep.subr.mxu0 0.0
    %291 = vmatpush1.msra.mxu0 0.0
    %292 = vmatprep.subr.mxu0 0.0
    %293 = vmatpush1.msra.mxu0 0.0
    %294 = vmatprep.subr.mxu0 0.0
    %295 = vmatpush1.msra.mxu0 0.0
    %296 = vmatprep.subr.mxu0 0.0
    %297 = vmatpush1.msra.mxu0 0.0
    %298 = vmatprep.subr.mxu0 0.0
    %299 = vmatpush1.msra.mxu0 0.0
    %300 = vmatprep.mubr.f32.mxu0 0.0
    %301 = vmatmul.mubr.f32.gmra.mrb[0].mxu0 %v212
    %v302 = vpop.f32.mrb[0].mxu0
    %v303 = vadd.f32 %v234, %v302
    %v304 = vpop.f32.mrb[0].mxu0
    %305 = vdwg.mxu0
    %v306 = vmax.f32 %v303, 0.0
    %307 = vst [vmem:[#allocation2] sm:$0xff] %v306
    %v308 = vld [vmem:[#allocation2] sm:$0xff]
    %s309 = scalar_lea.vmem [#allocation9], 128
    %v310 = vld [vmem:[%s309] sm:$0xff]
    %v311 = vld [vmem:[%s309 + $0x8] sm:$0xff]
    %v312 = vld [vmem:[%s309 + $0x10] sm:$0xff]
    %v313 = vld [vmem:[%s309 + $0x18] sm:$0xff]
    %v314 = vld [vmem:[%s309 + $0x20] sm:$0xff]
    %v315 = vld [vmem:[%s309 + $0x28] sm:$0xff]
    %v316 = vld [vmem:[%s309 + $0x30] sm:$0xff]
    %v317 = vld [vmem:[%s309 + $0x38] sm:$0xff]
    %v318 = vld [vmem:[%s309 + $0x40] sm:$0xff]
    %v319 = vld [vmem:[%s309 + $0x48] sm:$0xff]
    %v320 = vld [vmem:[%s309 + $0x50] sm:$0xff]
    %v321 = vld [vmem:[%s309 + $0x58] sm:$0xff]
    %v322 = vld [vmem:[%s309 + $0x60] sm:$0xff]
    %v323 = vld [vmem:[%s309 + $0x68] sm:$0xff]
    %v324 = vld [vmem:[%s309 + $0x70] sm:$0xff]
    %v325 = vld [vmem:[%s309 + $0x78] sm:$0xff]
    %s326 = scalar_lea.vmem [#allocation11], 1
    %v327 = vld [vmem:[%s326] sm:$0x1]
    %v329 = vlaneseq
    %v330 = vshrl.u32 %v329, 7
    %v331 = vsub.s32 0, %v330
    %v332 = vrot.slane %v327, %v331
    %334 = vmatprep.subr.mxu0 0.0
    %335 = vmatpush1.msra.mxu0 %v310
    %336 = vmatprep.subr.mxu0 0.0
    %337 = vmatpush1.msra.mxu0 %v311
    %338 = vmatprep.subr.mxu0 0.0
    %339 = vmatpush1.msra.mxu0 %v312
    %340 = vmatprep.subr.mxu0 0.0
    %341 = vmatpush1.msra.mxu0 %v313
    %342 = vmatprep.subr.mxu0 0.0
    %343 = vmatpush1.msra.mxu0 %v314
    %344 = vmatprep.subr.mxu0 0.0
    %345 = vmatpush1.msra.mxu0 %v315
    %346 = vmatprep.subr.mxu0 0.0
    %347 = vmatpush1.msra.mxu0 %v316
    %348 = vmatprep.subr.mxu0 0.0
    %349 = vmatpush1.msra.mxu0 %v317
    %350 = vmatprep.subr.mxu0 0.0
    %351 = vmatpush1.msra.mxu0 %v318
    %352 = vmatprep.subr.mxu0 0.0
    %353 = vmatpush1.msra.mxu0 %v319
    %354 = vmatprep.subr.mxu0 0.0
    %355 = vmatpush1.msra.mxu0 %v320
    %356 = vmatprep.subr.mxu0 0.0
    %357 = vmatpush1.msra.mxu0 %v321
    %358 = vmatprep.subr.mxu0 0.0
    %359 = vmatpush1.msra.mxu0 %v322
    %360 = vmatprep.subr.mxu0 0.0
    %361 = vmatpush1.msra.mxu0 %v323
    %362 = vmatprep.subr.mxu0 0.0
    %363 = vmatpush1.msra.mxu0 %v324
    %364 = vmatprep.subr.mxu0 0.0
    %365 = vmatpush1.msra.mxu0 %v325
    %366 = vmatprep.subr.mxu0 0.0
    %367 = vmatpush1.msra.mxu0 0.0
    %368 = vmatprep.subr.mxu0 0.0
    %369 = vmatpush1.msra.mxu0 0.0
    %370 = vmatprep.subr.mxu0 0.0
    %371 = vmatpush1.msra.mxu0 0.0
    %372 = vmatprep.subr.mxu0 0.0
    %373 = vmatpush1.msra.mxu0 0.0
    %374 = vmatprep.subr.mxu0 0.0
    %375 = vmatpush1.msra.mxu0 0.0
    %376 = vmatprep.subr.mxu0 0.0
    %377 = vmatpush1.msra.mxu0 0.0
    %378 = vmatprep.subr.mxu0 0.0
    %379 = vmatpush1.msra.mxu0 0.0
    %380 = vmatprep.subr.mxu0 0.0
    %381 = vmatpush1.msra.mxu0 0.0
    %382 = vmatprep.subr.mxu0 0.0
    %383 = vmatpush1.msra.mxu0 0.0
    %384 = vmatprep.subr.mxu0 0.0
    %385 = vmatpush1.msra.mxu0 0.0
    %386 = vmatprep.subr.mxu0 0.0
    %387 = vmatpush1.msra.mxu0 0.0
    %388 = vmatprep.subr.mxu0 0.0
    %389 = vmatpush1.msra.mxu0 0.0
    %390 = vmatprep.subr.mxu0 0.0
    %391 = vmatpush1.msra.mxu0 0.0
    %392 = vmatprep.subr.mxu0 0.0
    %393 = vmatpush1.msra.mxu0 0.0
    %394 = vmatprep.subr.mxu0 0.0
    %395 = vmatpush1.msra.mxu0 0.0
    %396 = vmatprep.subr.mxu0 0.0
    %397 = vmatpush1.msra.mxu0 0.0
    %398 = vmatprep.mubr.f32.mxu0 0.0
    %399 = vmatmul.mubr.f32.gmra.mrb[0].mxu0 %v308
    %v400 = vpop.f32.mrb[0].mxu0
    %v401 = vadd.f32 %v332, %v400
    %v402 = vpop.f32.mrb[0].mxu0
    %403 = vdwg.mxu0
    %v404 = vmax.f32 %v401, 0.0
    %405 = vst [vmem:[#allocation2] sm:$0xff] %v404
    %v406 = vld [vmem:[#allocation2] sm:$0xff]
    %v407 = vld [vmem:[#allocation12] sm:$0xff]
    %v408 = vld [vmem:[#allocation12 + $0x8] sm:$0xff]
    %v409 = vld [vmem:[#allocation12 + $0x10] sm:$0xff]
    %v410 = vld [vmem:[#allocation12 + $0x18] sm:$0xff]
    %v411 = vld [vmem:[#allocation12 + $0x20] sm:$0xff]
    %v412 = vld [vmem:[#allocation12 + $0x28] sm:$0xff]
    %v413 = vld [vmem:[#allocation12 + $0x30] sm:$0xff]
    %v414 = vld [vmem:[#allocation12 + $0x38] sm:$0xff]
    %v415 = vld [vmem:[#allocation12 + $0x40] sm:$0xff]
    %v416 = vld [vmem:[#allocation12 + $0x48] sm:$0xff]
    %v417 = vld [vmem:[#allocation12 + $0x50] sm:$0xff]
    %v418 = vld [vmem:[#allocation12 + $0x58] sm:$0xff]
    %v419 = vld [vmem:[#allocation12 + $0x60] sm:$0xff]
    %v420 = vld [vmem:[#allocation12 + $0x68] sm:$0xff]
    %v421 = vld [vmem:[#allocation12 + $0x70] sm:$0xff]
    %v422 = vld [vmem:[#allocation12 + $0x78] sm:$0xff]
    %v423 = vld [vmem:[#allocation14] sm:$0x1]
    %v425 = vlaneseq
    %v426 = vshrl.u32 %v425, 7
    %v427 = vsub.s32 0, %v426
    %v428 = vrot.slane %v423, %v427
    %430 = vmatprep.subr.mxu0 0.0
    %431 = vmatpush1.msra.mxu0 %v407
    %432 = vmatprep.subr.mxu0 0.0
    %433 = vmatpush1.msra.mxu0 %v408
    %434 = vmatprep.subr.mxu0 0.0
    %435 = vmatpush1.msra.mxu0 %v409
    %436 = vmatprep.subr.mxu0 0.0
    %437 = vmatpush1.msra.mxu0 %v410
    %438 = vmatprep.subr.mxu0 0.0
    %439 = vmatpush1.msra.mxu0 %v411
    %440 = vmatprep.subr.mxu0 0.0
    %441 = vmatpush1.msra.mxu0 %v412
    %442 = vmatprep.subr.mxu0 0.0
    %443 = vmatpush1.msra.mxu0 %v413
    %444 = vmatprep.subr.mxu0 0.0
    %445 = vmatpush1.msra.mxu0 %v414
    %446 = vmatprep.subr.mxu0 0.0
    %447 = vmatpush1.msra.mxu0 %v415
    %448 = vmatprep.subr.mxu0 0.0
    %449 = vmatpush1.msra.mxu0 %v416
    %450 = vmatprep.subr.mxu0 0.0
    %451 = vmatpush1.msra.mxu0 %v417
    %452 = vmatprep.subr.mxu0 0.0
    %453 = vmatpush1.msra.mxu0 %v418
    %454 = vmatprep.subr.mxu0 0.0
    %455 = vmatpush1.msra.mxu0 %v419
    %456 = vmatprep.subr.mxu0 0.0
    %457 = vmatpush1.msra.mxu0 %v420
    %458 = vmatprep.subr.mxu0 0.0
    %459 = vmatpush1.msra.mxu0 %v421
    %460 = vmatprep.subr.mxu0 0.0
    %461 = vmatpush1.msra.mxu0 %v422
    %462 = vmatprep.subr.mxu0 0.0
    %463 = vmatpush1.msra.mxu0 0.0
    %464 = vmatprep.subr.mxu0 0.0
    %465 = vmatpush1.msra.mxu0 0.0
    %466 = vmatprep.subr.mxu0 0.0
    %467 = vmatpush1.msra.mxu0 0.0
    %468 = vmatprep.subr.mxu0 0.0
    %469 = vmatpush1.msra.mxu0 0.0
    %470 = vmatprep.subr.mxu0 0.0
    %471 = vmatpush1.msra.mxu0 0.0
    %472 = vmatprep.subr.mxu0 0.0
    %473 = vmatpush1.msra.mxu0 0.0
    %474 = vmatprep.subr.mxu0 0.0
    %475 = vmatpush1.msra.mxu0 0.0
    %476 = vmatprep.subr.mxu0 0.0
    %477 = vmatpush1.msra.mxu0 0.0
    %478 = vmatprep.subr.mxu0 0.0
    %479 = vmatpush1.msra.mxu0 0.0
    %480 = vmatprep.subr.mxu0 0.0
    %481 = vmatpush1.msra.mxu0 0.0
    %482 = vmatprep.subr.mxu0 0.0
    %483 = vmatpush1.msra.mxu0 0.0
    %484 = vmatprep.subr.mxu0 0.0
    %485 = vmatpush1.msra.mxu0 0.0
    %486 = vmatprep.subr.mxu0 0.0
    %487 = vmatpush1.msra.mxu0 0.0
    %488 = vmatprep.subr.mxu0 0.0
    %489 = vmatpush1.msra.mxu0 0.0
    %490 = vmatprep.subr.mxu0 0.0
    %491 = vmatpush1.msra.mxu0 0.0
    %492 = vmatprep.subr.mxu0 0.0
    %493 = vmatpush1.msra.mxu0 0.0
    %494 = vmatprep.mubr.f32.mxu0 0.0
    %495 = vmatmul.mubr.f32.gmra.mrb[0].mxu0 %v406
    %v496 = vpop.f32.mrb[0].mxu0
    %v497 = vadd.f32 %v428, %v496
    %v498 = vpop.f32.mrb[0].mxu0
    %499 = vdwg.mxu0
    %500 = vst [vmem:[#allocation15] sm:$0xff] %v497
    // Predicated region
    $region58: #{tpu_custom_call.1} parent=1 // pred_check
      _
    $region59: #{tpu_custom_call.1} parent=1 // pred_check_branch
      %502 = sbr.rel (0) target = $region61
    $region60: #{tpu_custom_call.1} parent=1 // pred_region
      %s504 = ssub.s32 128, 128
      %505 = vsyncadd [#allocation5], %s504
      %s507 = sshll.u32 [#allocation15], 4
      %s508 = int_to_ptr.vmem [resolvable:$true] %s507
      %510 = dma.vmem_to_hbm [thread:$0]  %s508, 128, %s7, [#allocation5]
    $region61: #{tpu_custom_call.1} parent=1 // pred_fallthru
      _
    // Predicated region
    $region62: #{tpu_custom_call.1} parent=1 // pred_check
      _
    $region63: #{tpu_custom_call.1} parent=1 // pred_check_branch
      %512 = sbr.rel (0) target = $region65
    $region64: #{tpu_custom_call.1} parent=1 // pred_region
      %513 = dma.done [#allocation5], 128
    $region65: #{tpu_custom_call.1} parent=1 // pred_fallthru
      _
    %514 = vsyncpa [#allocation4], 1
    %515 = vsyncpa [#allocation7], 1
    %516 = vsyncpa [#allocation10], 1
    %517 = vsyncpa [#allocation13], 1
    %518 = vsyncpa [#allocation5], 1

</llo_original>
